<compile_context>
chip_gen: v7x
topology: tpu7x:2x2x1
jax: 0.10.0
libtpu: 0.0.40
codegen_flags: <defaults>
</compile_context>

<pallas_src>
import math

import jax
import jax.numpy as jnp
from jax.experimental import pallas as pl
from jax.experimental.pallas import tpu as pltpu


def _round_up(x, m):
    return ((x + m - 1) // m) * m


def ffn_kernel(x_ref, w1_ref, b1_ref, w2_ref, b2_ref, o_ref, acc_ref):
    # grid = (row_tiles, out_dim_tiles); axis 1 is the reduction over out_dim.
    # x_ref : (tm, Hp)  bf16      w1_ref: (Hp, tn) bf16   b1_ref: (1, tn) f32
    # w2_ref: (tn, Hp)  bf16      b2_ref: (1, Hp)  f32
    # o_ref : (tm, Hp)  out dtype acc_ref: (tm, Hp) f32 scratch
    j = pl.program_id(1)

    @pl.when(j == 0)
    def _():
        # Initialize the accumulator with the second-layer bias (added once).
        acc_ref[...] = jnp.broadcast_to(b2_ref[...], acc_ref.shape)

    # First linear + ReLU, restricted to this out_dim tile (bounded live h).
    h = jnp.dot(x_ref[...], w1_ref[...], preferred_element_type=jnp.float32)
    h = jnp.maximum(h + b1_ref[...], 0.0)

    # Partial second linear contribution of this out_dim tile.
    acc_ref[...] += jnp.dot(h.astype(w2_ref.dtype), w2_ref[...],
                            preferred_element_type=jnp.float32)

    @pl.when(j == pl.num_programs(1) - 1)
    def _():
        o_ref[...] = acc_ref[...].astype(o_ref.dtype)


def ffn_forward(out, batch_size, w1, b1, w2, b2, *,
                tm=256, tn=512, compute_dtype=jnp.bfloat16):
    """Mirrors FFN.forward: view(-1, hidden) -> Linear/ReLU/Linear -> view(B, -1, hidden).

    Weights are given as (in, out) so the kernel computes x @ W directly.
    """
    hidden_dim = w1.shape[0]
    out_dim = w1.shape[1]
    out_dtype = out.dtype

    x = out.reshape(-1, hidden_dim)
    M = x.shape[0]

    # Lane-dense padded feature dims (multiples of 128).
    Hp = _round_up(hidden_dim, 128)
    Np = _round_up(out_dim, 128)
    tn = min(tn, Np)
    Np = _round_up(Np, tn)          # make the reduction axis divide evenly

    # Row tile: MXU-aligned when possible, never larger than the padded M;
    # pad M up so ragged inputs are handled (padding rows are zeros, sliced off).
    tm = min(tm, _round_up(M, 8))
    Mp = _round_up(M, tm)

    cd = compute_dtype

    # Zero padding keeps the math exact: padded hidden cols of x are 0, padded
    # out_dim cols of W1/b1 are 0 (so ReLU gives 0), padded rows of W2 are 0.
    x_p = jnp.zeros((Mp, Hp), cd).at[:M, :hidden_dim].set(x.astype(cd))
    w1_p = jnp.zeros((Hp, Np), cd).at[:hidden_dim, :out_dim].set(w1.astype(cd))
    b1_p = jnp.zeros((1, Np), jnp.float32).at[0, :out_dim].set(
        b1.astype(jnp.float32))
    w2_p = jnp.zeros((Np, Hp), cd).at[:out_dim, :hidden_dim].set(w2.astype(cd))
    b2_p = jnp.zeros((1, Hp), jnp.float32).at[0, :hidden_dim].set(
        b2.astype(jnp.float32))

    grid = (Mp // tm, Np // tn)

    itemsize = jnp.dtype(cd).itemsize
    bytes_accessed = (
        x_p.size * itemsize + w1_p.size * itemsize + w2_p.size * itemsize
        + b1_p.size * 4 + b2_p.size * 4
        + Mp * Hp * jnp.dtype(out_dtype).itemsize)
    flops = 2 * Mp * Hp * Np + 2 * Mp * Np * Hp   # both matmuls

    y = pl.pallas_call(
        ffn_kernel,
        out_shape=jax.ShapeDtypeStruct((Mp, Hp), out_dtype),
        grid=grid,
        in_specs=[
            pl.BlockSpec((tm, Hp), lambda i, j: (i, 0)),   # x row tile
            pl.BlockSpec((Hp, tn), lambda i, j: (0, j)),   # W1 column tile
            pl.BlockSpec((1, tn), lambda i, j: (0, j)),    # b1 tile
            pl.BlockSpec((tn, Hp), lambda i, j: (j, 0)),   # W2 row tile
            pl.BlockSpec((1, Hp), lambda i, j: (0, 0)),    # b2 (full)
        ],
        out_specs=pl.BlockSpec((tm, Hp), lambda i, j: (i, 0)),
        scratch_shapes=[pltpu.VMEM((tm, Hp), jnp.float32)],
        compiler_params=pltpu.CompilerParams(
            dimension_semantics=("parallel", "arbitrary"),
            vmem_limit_bytes=64 * 1024 * 1024,
        ),
        cost_estimate=pl.CostEstimate(
            flops=flops, transcendentals=0, bytes_accessed=bytes_accessed),
    )(x_p, w1_p, b1_p, w2_p, b2_p)

    y = y[:M, :hidden_dim]
    return y.reshape(batch_size, -1, hidden_dim)


def init_linear(key, in_features, out_features, dtype=jnp.float32):
    # Deterministic init mimicking torch.nn.Linear default (uniform +-1/sqrt(fan_in)).
    kw, kb = jax.random.split(key)
    bound = 1.0 / math.sqrt(in_features)
    # Stored as (in, out) so the kernel does x @ W directly (PyTorch stores (out, in)).
    w = jax.random.uniform(kw, (in_features, out_features), dtype, -bound, bound)
    b = jax.random.uniform(kb, (out_features,), dtype, -bound, bound)
    return w, b


if __name__ == "__main__":
    hidden_dim = 64
    out_dim = 32
    batch_size = 2
    seq_len = 8

    key = jax.random.PRNGKey(0)
    kx, k1, k2 = jax.random.split(key, 3)

    x = jax.random.normal(kx, (batch_size, seq_len, hidden_dim), jnp.float32)
    w1, b1 = init_linear(k1, hidden_dim, out_dim)
    w2, b2 = init_linear(k2, out_dim, hidden_dim)

    y = ffn_forward(x, batch_size, w1, b1, w2, b2)
    jax.block_until_ready(y)

    # Pure-JAX reference using the same bf16 operands / f32 accumulation.
    cd = jnp.bfloat16
    x2 = x.reshape(-1, hidden_dim)
    h_ref = jnp.maximum(
        jnp.dot(x2.astype(cd), w1.astype(cd),
                preferred_element_type=jnp.float32) + b1, 0.0)
    ref = jnp.dot(h_ref.astype(cd), w2.astype(cd),
                  preferred_element_type=jnp.float32) + b2
    ref = ref.reshape(batch_size, -1, hidden_dim)

    assert y.shape == (batch_size, seq_len, hidden_dim)
    assert jnp.allclose(y, ref, atol=2e-3, rtol=2e-3), \
        float(jnp.max(jnp.abs(y - ref)))

    # Sanity vs. full-f32 math (bf16 rounding tolerance).
    ref_f32 = (jnp.maximum(x2 @ w1 + b1, 0.0) @ w2 + b2).reshape(
        batch_size, -1, hidden_dim)
    assert jnp.allclose(y, ref_f32, atol=3e-2, rtol=3e-2)

    print("KERNEL_OK")
</pallas_src>

<mosaic_0001>
module attributes {stable_mosaic.version = 11 : i64} {
  func.func @ffn_kernel(%arg0: i32, %arg1: i32, %arg2: memref<16x128xbf16, #tpu.memory_space<vmem>>, %arg3: memref<128x128xbf16, #tpu.memory_space<vmem>>, %arg4: memref<1x128xf32, #tpu.memory_space<vmem>>, %arg5: memref<128x128xbf16, #tpu.memory_space<vmem>>, %arg6: memref<1x128xf32, #tpu.memory_space<vmem>>, %arg7: memref<16x128xf32, #tpu.memory_space<vmem>>, %arg8: memref<16x128xf32, #tpu.memory_space<vmem>>) attributes {dimension_semantics = [#tpu.dimension_semantics<parallel>, #tpu.dimension_semantics<arbitrary>], iteration_bounds = array<i64: 1, 1>, scalar_prefetch = 0 : i64, scratch_operands = 1 : i64, tpu.core_type = #tpu.core_type<tc>, window_params = [{transform_indices = @transform_0, window_bounds = array<i64: 16, 128>}, {transform_indices = @transform_1, window_bounds = array<i64: 128, 128>}, {transform_indices = @transform_2, window_bounds = array<i64: 1, 128>}, {transform_indices = @transform_3, window_bounds = array<i64: 128, 128>}, {pipeline_mode = #tpu.pipeline_mode<synchronous>, transform_indices = @transform_4, window_bounds = array<i64: 1, 128>}, {transform_indices = @transform_5, window_bounds = array<i64: 16, 128>}]} {
    %c0_i32 = arith.constant 0 : i32
    %0 = arith.cmpi eq, %arg1, %c0_i32 : i32
    %1 = arith.extui %0 : i1 to i32
    %c0_i32_0 = arith.constant 0 : i32
    %2 = arith.cmpi ne, %1, %c0_i32_0 : i32
    scf.if %2 {
      %c0_16 = arith.constant 0 : index
      %c0_17 = arith.constant 0 : index
      %20 = vector.load %arg6[%c0_16, %c0_17] : memref<1x128xf32, #tpu.memory_space<vmem>>, vector<1x128xf32>
      %21 = vector.shape_cast %20 : vector<1x128xf32> to vector<1x128xf32>
      %22 = vector.broadcast %21 : vector<1x128xf32> to vector<16x128xf32>
      %c0_18 = arith.constant 0 : index
      %c0_19 = arith.constant 0 : index
      %23 = vector.load %arg8[%c0_18, %c0_19] : memref<16x128xf32, #tpu.memory_space<vmem>>, vector<16x128xf32>
      tpu.vector_store %arg8[%c0_18, %c0_19], %22 {strides = array<i32>} : memref<16x128xf32, #tpu.memory_space<vmem>>, vector<16x128xf32>,
    } else {
    }
    %c0 = arith.constant 0 : index
    %c0_1 = arith.constant 0 : index
    %3 = vector.load %arg2[%c0, %c0_1] : memref<16x128xbf16, #tpu.memory_space<vmem>>, vector<16x128xbf16>
    %c0_2 = arith.constant 0 : index
    %c0_3 = arith.constant 0 : index
    %4 = vector.load %arg3[%c0_2, %c0_3] : memref<128x128xbf16, #tpu.memory_space<vmem>>, vector<128x128xbf16>
    %cst = arith.constant dense<0.000000e+00> : vector<16x128xf32>
    %5 = tpu.matmul %3, %4, %cst {dimension_numbers = #tpu.dot_dimension_numbers<[1], [0], [0], [1], [0, 0, 1, 1], [], []>} : vector<16x128xbf16>, vector<128x128xbf16>, vector<16x128xf32> -> vector<16x128xf32>
    %c0_4 = arith.constant 0 : index
    %c0_5 = arith.constant 0 : index
    %6 = vector.load %arg4[%c0_4, %c0_5] : memref<1x128xf32, #tpu.memory_space<vmem>>, vector<1x128xf32>
    %7 = vector.broadcast %6 : vector<1x128xf32> to vector<16x128xf32>
    %8 = arith.addf %5, %7 : vector<16x128xf32>
    %cst_6 = arith.constant 0.000000e+00 : f32
    %9 = vector.broadcast %cst_6 : f32 to vector<16x128xf32>
    %10 = arith.maximumf %8, %9 : vector<16x128xf32>
    %c0_7 = arith.constant 0 : index
    %c0_8 = arith.constant 0 : index
    %11 = vector.load %arg8[%c0_7, %c0_8] : memref<16x128xf32, #tpu.memory_space<vmem>>, vector<16x128xf32>
    %12 = arith.truncf %10 : vector<16x128xf32> to vector<16x128xbf16>
    %c0_9 = arith.constant 0 : index
    %c0_10 = arith.constant 0 : index
    %13 = vector.load %arg5[%c0_9, %c0_10] : memref<128x128xbf16, #tpu.memory_space<vmem>>, vector<128x128xbf16>
    %cst_11 = arith.constant dense<0.000000e+00> : vector<16x128xf32>
    %14 = tpu.matmul %12, %13, %cst_11 {dimension_numbers = #tpu.dot_dimension_numbers<[1], [0], [0], [1], [0, 0, 1, 1], [], []>} : vector<16x128xbf16>, vector<128x128xbf16>, vector<16x128xf32> -> vector<16x128xf32>
    %15 = arith.addf %11, %14 : vector<16x128xf32>
    %c0_12 = arith.constant 0 : index
    %c0_13 = arith.constant 0 : index
    %16 = vector.load %arg8[%c0_12, %c0_13] : memref<16x128xf32, #tpu.memory_space<vmem>>, vector<16x128xf32>
    tpu.vector_store %arg8[%c0_12, %c0_13], %15 {strides = array<i32>} : memref<16x128xf32, #tpu.memory_space<vmem>>, vector<16x128xf32>,
    %c0_i32_14 = arith.constant 0 : i32
    %17 = arith.cmpi eq, %arg1, %c0_i32_14 : i32
    %18 = arith.extui %17 : i1 to i32
    %c0_i32_15 = arith.constant 0 : i32
    %19 = arith.cmpi ne, %18, %c0_i32_15 : i32
    scf.if %19 {
      %c0_16 = arith.constant 0 : index
      %c0_17 = arith.constant 0 : index
      %20 = vector.load %arg8[%c0_16, %c0_17] : memref<16x128xf32, #tpu.memory_space<vmem>>, vector<16x128xf32>
      %c0_18 = arith.constant 0 : index
      %c0_19 = arith.constant 0 : index
      %21 = vector.load %arg7[%c0_18, %c0_19] : memref<16x128xf32, #tpu.memory_space<vmem>>, vector<16x128xf32>
      tpu.vector_store %arg7[%c0_18, %c0_19], %20 {strides = array<i32>} : memref<16x128xf32, #tpu.memory_space<vmem>>, vector<16x128xf32>,
    } else {
    }
    return
  }
  func.func @transform_0(%arg0: i32, %arg1: i32) -> (i32, i32) {
    %c0_i32 = arith.constant 0 : i32
    %c0_i32_0 = arith.constant 0 : i32
    return %arg0, %c0_i32 : i32, i32
  }
  func.func @transform_1(%arg0: i32, %arg1: i32) -> (i32, i32) {
    %c0_i32 = arith.constant 0 : i32
    %c0_i32_0 = arith.constant 0 : i32
    return %c0_i32, %arg1 : i32, i32
  }
  func.func @transform_2(%arg0: i32, %arg1: i32) -> (i32, i32) {
    %c0_i32 = arith.constant 0 : i32
    %c0_i32_0 = arith.constant 0 : i32
    return %c0_i32, %arg1 : i32, i32
  }
  func.func @transform_3(%arg0: i32, %arg1: i32) -> (i32, i32) {
    %c0_i32 = arith.constant 0 : i32
    %c0_i32_0 = arith.constant 0 : i32
    return %arg1, %c0_i32 : i32, i32
  }
  func.func @transform_4(%arg0: i32, %arg1: i32) -> (i32, i32) {
    %c0_i32 = arith.constant 0 : i32
    %c0_i32_0 = arith.constant 0 : i32
    %c0_i32_1 = arith.constant 0 : i32
    return %c0_i32, %c0_i32_0 : i32, i32
  }
  func.func @transform_5(%arg0: i32, %arg1: i32) -> (i32, i32) {
    %c0_i32 = arith.constant 0 : i32
    %c0_i32_0 = arith.constant 0 : i32
    return %arg0, %c0_i32 : i32, i32
  }
}

</mosaic_0001>

<llo_original>
// kernel: tpu_custom_call.1
$region0: #{tpu_custom_call.1}
  #allocation0 [shape = 'u32[]', space=smem, size = 0x4, offset = 0x4, fixed_abs, tag = 'smem constant byte address 0x4 - core index']
  #allocation1 [shape = 'u32[144,128]{1,0:T(1,128)}', space=vmem, size = 0x12000, scoped, tag = 'internal scratch']
  #allocation2 [shape = 'f32[16,128]{1,0:T(8,128)}', space=vmem, size = 0x2000, scoped, tag = 'scratch operand']
  %s0 = inlined_call_operand.hbm [shape: bf16[16,128], index: 0, kind: input, shape index: {}]
  %s1 = inlined_call_operand.hbm [shape: bf16[128,128], index: 1, kind: input, shape index: {}]
  %s2 = inlined_call_operand.hbm [shape: f32[1,128], index: 2, kind: input, shape index: {}]
  %s3 = inlined_call_operand.hbm [shape: bf16[128,128], index: 3, kind: input, shape index: {}]
  %s4 = inlined_call_operand.hbm [shape: f32[1,128], index: 4, kind: input, shape index: {}]
  %s5 = inlined_call_operand.hbm [shape: f32[16,128], index: 5, kind: output, shape index: {}]
  %s6 = sld [smem:[#allocation0]]
  $region58: #{tpu_custom_call.1} parent=0
    _
  %s8 = ssub.s32 1, %s6
  %s9 = scalar_select 0, %s8, %s6
  $region1: #{tpu_custom_call.1} parent=0
    #allocation3 [shape = 'u8[4096]{0}', space=vmem, size = 0x1000, scoped, tag = 'input window, operand 0, single buffered']
    #allocation4 [shape = 's32[1]{0}', space=sflag, size = 0x4, scoped, tag = 'scoped memory for tpu_custom_call.1']
    #allocation5 [shape = 's32[1]{0}', space=sflag, size = 0x4, scoped, tag = 'scoped memory for tpu_custom_call.1']
    #allocation6 [shape = 'u8[32768]{0}', space=vmem, size = 0x8000, scoped, tag = 'input window, operand 1, single buffered']
    #allocation7 [shape = 's32[1]{0}', space=sflag, size = 0x4, scoped, tag = 'scoped memory for tpu_custom_call.1']
    #allocation8 [shape = 'u8[512]{0}', space=vmem, size = 0x400, scoped, tag = 'input window, operand 2, single buffered']
    #allocation9 [shape = 'u8[32768]{0}', space=vmem, size = 0x8000, scoped, tag = 'input window, operand 3, single buffered']
    #allocation10 [shape = 's32[1]{0}', space=sflag, size = 0x4, scoped, tag = 'scoped memory for tpu_custom_call.1']
    #allocation11 [shape = 'u8[512]{0}', space=vmem, size = 0x400, scoped, tag = 'input window, operand 4, single buffered']
    #allocation12 [shape = 'u8[8192]{0}', space=vmem, size = 0x2000, scoped, tag = 'output window, operand 0, single buffered']
    %10 = vsyncpa [#allocation4], 0
    %11 = vsyncpa [#allocation7], 0
    %12 = vsyncpa [#allocation10], 0
    %13 = vsyncpa [#allocation5], 0
    // Predicated region
    $region2: #{tpu_custom_call.1} parent=1 // pred_check
      _
    $region3: #{tpu_custom_call.1} parent=1 // pred_check_branch
      %15 = sbr.rel (0) target = $region5
    $region4: #{tpu_custom_call.1} parent=1 // pred_region
      %s17 = ssub.s32 128, 128
      %18 = vsyncadd [#allocation4], %s17
      %s19 = sshll.u32 [#allocation3], 4
      %s20 = int_to_ptr.vmem [resolvable:$true] %s19
      %25 = dma.hbm_to_vmem [thread:$0]  %s0, 128, %s20, [#allocation4], 64, 64, 4
    $region5: #{tpu_custom_call.1} parent=1 // pred_fallthru
      _
    // Predicated region
    $region6: #{tpu_custom_call.1} parent=1 // pred_check
      _
    $region7: #{tpu_custom_call.1} parent=1 // pred_check_branch
      %27 = sbr.rel (0) target = $region9
    $region8: #{tpu_custom_call.1} parent=1 // pred_region
      %s29 = ssub.s32 1024, 1024
      %30 = vsyncadd [#allocation7], %s29
      %s31 = sshll.u32 [#allocation6], 4
      %s32 = int_to_ptr.vmem [resolvable:$true] %s31
      %37 = dma.hbm_to_vmem [thread:$0]  %s1, 1024, %s32, [#allocation7], 64, 64, 4
    $region9: #{tpu_custom_call.1} parent=1 // pred_fallthru
      _
    // Predicated region
    $region10: #{tpu_custom_call.1} parent=1 // pred_check
      _
    $region11: #{tpu_custom_call.1} parent=1 // pred_check_branch
      %39 = sbr.rel (0) target = $region13
    $region12: #{tpu_custom_call.1} parent=1 // pred_region
      %s41 = ssub.s32 16, 16
      %42 = vsyncadd [#allocation7], %s41
      %s44 = sshll.u32 [#allocation8], 4
      %s45 = int_to_ptr.vmem [resolvable:$true] %s44
      %47 = dma.hbm_to_vmem [thread:$0]  %s2, 16, %s45, [#allocation7]
    $region13: #{tpu_custom_call.1} parent=1 // pred_fallthru
      _
    // Predicated region
    $region14: #{tpu_custom_call.1} parent=1 // pred_check
      _
    $region15: #{tpu_custom_call.1} parent=1 // pred_check_branch
      %49 = sbr.rel (0) target = $region17
    $region16: #{tpu_custom_call.1} parent=1 // pred_region
      %s51 = ssub.s32 1024, 1024
      %52 = vsyncadd [#allocation10], %s51
      %s53 = sshll.u32 [#allocation9], 4
      %s54 = int_to_ptr.vmem [resolvable:$true] %s53
      %59 = dma.hbm_to_vmem [thread:$0]  %s3, 1024, %s54, [#allocation10], 64, 64, 4
    $region17: #{tpu_custom_call.1} parent=1 // pred_fallthru
      _
    // Predicated region
    $region18: #{tpu_custom_call.1} parent=1 // pred_check
      _
    $region19: #{tpu_custom_call.1} parent=1 // pred_check_branch
      %61 = sbr.rel (0) target = $region21
    $region20: #{tpu_custom_call.1} parent=1 // pred_region
      %s63 = ssub.s32 16, 16
      %64 = vsyncadd [#allocation10], %s63
      %s66 = sshll.u32 [#allocation11], 4
      %s67 = int_to_ptr.vmem [resolvable:$true] %s66
      %69 = dma.hbm_to_vmem [thread:$0]  %s4, 16, %s67, [#allocation10]
    $region21: #{tpu_custom_call.1} parent=1 // pred_fallthru
      _
    // Predicated region
    $region22: #{tpu_custom_call.1} parent=1 // pred_check
      _
    $region23: #{tpu_custom_call.1} parent=1 // pred_check_branch
      %71 = sbr.rel (0) target = $region25
    $region24: #{tpu_custom_call.1} parent=1 // pred_region
      %72 = dma.done [#allocation4], 128
    $region25: #{tpu_custom_call.1} parent=1 // pred_fallthru
      _
    // Predicated region
    $region26: #{tpu_custom_call.1} parent=1 // pred_check
      _
    $region27: #{tpu_custom_call.1} parent=1 // pred_check_branch
      %74 = sbr.rel (0) target = $region29
    $region28: #{tpu_custom_call.1} parent=1 // pred_region
      %75 = dma.done [#allocation7], 1024
    $region29: #{tpu_custom_call.1} parent=1 // pred_fallthru
      _
    // Predicated region
    $region30: #{tpu_custom_call.1} parent=1 // pred_check
      _
    $region31: #{tpu_custom_call.1} parent=1 // pred_check_branch
      %77 = sbr.rel (0) target = $region33
    $region32: #{tpu_custom_call.1} parent=1 // pred_region
      %78 = dma.done [#allocation7], 16
    $region33: #{tpu_custom_call.1} parent=1 // pred_fallthru
      _
    // Predicated region
    $region34: #{tpu_custom_call.1} parent=1 // pred_check
      _
    $region35: #{tpu_custom_call.1} parent=1 // pred_check_branch
      %80 = sbr.rel (0) target = $region37
    $region36: #{tpu_custom_call.1} parent=1 // pred_region
      %81 = dma.done [#allocation10], 1024
    $region37: #{tpu_custom_call.1} parent=1 // pred_fallthru
      _
    // Predicated region
    $region38: #{tpu_custom_call.1} parent=1 // pred_check
      _
    $region39: #{tpu_custom_call.1} parent=1 // pred_check_branch
      %83 = sbr.rel (0) target = $region41
    $region40: #{tpu_custom_call.1} parent=1 // pred_region
      %84 = dma.done [#allocation10], 16
    $region41: #{tpu_custom_call.1} parent=1 // pred_fallthru
      _
    %p86 = scmp.eq.s32.totalorder 0, 0
    // Predicated region
    $region42: #{tpu_custom_call.1} parent=1 // pred_check
      %p87 = pneg %p86
    $region43: #{tpu_custom_call.1} parent=1 // pred_check_branch
      %89 = sbr.rel (%p87) target = $region45
    $region44: #{tpu_custom_call.1} parent=1 // pred_region
      %v90 = vld [vmem:[#allocation11] sm:$0x1]
      %v92 = vlaneseq
      %v93 = vshrl.u32 %v92, 7
      %v94 = vsub.s32 0, %v93
      %v95 = vrot.slane %v90, %v94
      %97 = vst [vmem:[#allocation2] sm:$0xff] %v95
      %98 = vst [vmem:[#allocation2 + $0x8] sm:$0xff] %v95
    $region45: #{tpu_custom_call.1} parent=1 // pred_fallthru
      _
    %v99 = vld [vmem:[#allocation3] sm:$0xf]
    %v100 = vld [vmem:[#allocation3 + $0x4] sm:$0xf]
    %v101 = vld [vmem:[#allocation6] sm:$0xf]
    %v102 = vld [vmem:[#allocation6 + $0x4] sm:$0xf]
    %v103 = vld [vmem:[#allocation6 + $0x8] sm:$0xf]
    %v104 = vld [vmem:[#allocation6 + $0xc] sm:$0xf]
    %v105 = vld [vmem:[#allocation6 + $0x10] sm:$0xf]
    %v106 = vld [vmem:[#allocation6 + $0x14] sm:$0xf]
    %v107 = vld [vmem:[#allocation6 + $0x18] sm:$0xf]
    %v108 = vld [vmem:[#allocation6 + $0x1c] sm:$0xf]
    %v109 = vld [vmem:[#allocation6 + $0x20] sm:$0xf]
    %v110 = vld [vmem:[#allocation6 + $0x24] sm:$0xf]
    %v111 = vld [vmem:[#allocation6 + $0x28] sm:$0xf]
    %v112 = vld [vmem:[#allocation6 + $0x2c] sm:$0xf]
    %v113 = vld [vmem:[#allocation6 + $0x30] sm:$0xf]
    %v114 = vld [vmem:[#allocation6 + $0x34] sm:$0xf]
    %v115 = vld [vmem:[#allocation6 + $0x38] sm:$0xf]
    %v116 = vld [vmem:[#allocation6 + $0x3c] sm:$0xf]
    %v117 = vld [vmem:[#allocation8] sm:$0x1]
    %v119 = vlaneseq
    %v120 = vshrl.u32 %v119, 7
    %v121 = vsub.s32 0, %v120
    %v122 = vrot.slane %v117, %v121
    %v126 = vunpack.c.l.b16 %v99
    %v127 = vunpack.c.l.b16 %v100
    %v128 = vpack.c.b16 %v127, %v126
    %v146 = vunpack.c.l.b16 %v101
    %v147 = vunpack.c.l.b16 %v102
    %v148 = vunpack.c.l.b16 %v103
    %v149 = vunpack.c.l.b16 %v104
    %v150 = vunpack.c.l.b16 %v105
    %v151 = vunpack.c.l.b16 %v106
    %v152 = vunpack.c.l.b16 %v107
    %v153 = vunpack.c.l.b16 %v108
    %v154 = vunpack.c.l.b16 %v109
    %v155 = vunpack.c.l.b16 %v110
    %v156 = vunpack.c.l.b16 %v111
    %v157 = vunpack.c.l.b16 %v112
    %v158 = vunpack.c.l.b16 %v113
    %v159 = vunpack.c.l.b16 %v114
    %v160 = vunpack.c.l.b16 %v115
    %v161 = vunpack.c.l.b16 %v116
    %v162 = vpack.c.b16 %v147, %v146
    %v163 = vpack.c.b16 %v149, %v148
    %v164 = vpack.c.b16 %v151, %v150
    %v165 = vpack.c.b16 %v153, %v152
    %v166 = vpack.c.b16 %v155, %v154
    %v167 = vpack.c.b16 %v157, %v156
    %v168 = vpack.c.b16 %v159, %v158
    %v169 = vpack.c.b16 %v161, %v160
    %178 = vmatprep.subr.bf16.mxu0 0
    %179 = vmatpush1.bf16.msra.mxu0 %v162
    %180 = vmatprep.subr.bf16.mxu0 0
    %181 = vmatpush1.bf16.msra.mxu0 %v163
    %182 = vmatprep.subr.bf16.mxu0 0
    %183 = vmatpush1.bf16.msra.mxu0 %v164
    %184 = vmatprep.subr.bf16.mxu0 0
    %185 = vmatpush1.bf16.msra.mxu0 %v165
    %186 = vmatprep.subr.bf16.mxu0 0
    %187 = vmatpush1.bf16.msra.mxu0 %v166
    %188 = vmatprep.subr.bf16.mxu0 0
    %189 = vmatpush1.bf16.msra.mxu0 %v167
    %190 = vmatprep.subr.bf16.mxu0 0
    %191 = vmatpush1.bf16.msra.mxu0 %v168
    %192 = vmatprep.subr.bf16.mxu0 0
    %193 = vmatpush1.bf16.msra.mxu0 %v169
    %194 = vmatprep.subr.bf16.mxu0 0
    %195 = vmatpush1.bf16.msra.mxu0 0
    %196 = vmatprep.subr.bf16.mxu0 0
    %197 = vmatpush1.bf16.msra.mxu0 0
    %198 = vmatprep.subr.bf16.mxu0 0
    %199 = vmatpush1.bf16.msra.mxu0 0
    %200 = vmatprep.subr.bf16.mxu0 0
    %201 = vmatpush1.bf16.msra.mxu0 0
    %202 = vmatprep.subr.bf16.mxu0 0
    %203 = vmatpush1.bf16.msra.mxu0 0
    %204 = vmatprep.subr.bf16.mxu0 0
    %205 = vmatpush1.bf16.msra.mxu0 0
    %206 = vmatprep.subr.bf16.mxu0 0
    %207 = vmatpush1.bf16.msra.mxu0 0
    %208 = vmatprep.subr.bf16.mxu0 0
    %209 = vmatpush1.bf16.msra.mxu0 0
    %210 = vmatprep.mubr.bf16.mxu0 0
    %211 = vmatmul.mubr.bf16.gmra.mrb[0].mxu0 %v128
    %v212 = vpop.f32.mrb[0].mxu0
    %v213 = vadd.f32 %v122, %v212
    %v214 = vpop.f32.mrb[0].mxu0
    %v215 = vpop.f32.mrb[0].mxu0
    %v216 = vadd.f32 %v122, %v215
    %v217 = vpop.f32.mrb[0].mxu0
    %218 = vdwg.mxu0
    %v219 = vmax.f32 %v213, 0.0
    %v220 = vmax.f32 %v216, 0.0
    %v221 = vld [vmem:[#allocation2] sm:$0xff]
    %v222 = vld [vmem:[#allocation2 + $0x8] sm:$0xff]
    %v223 = vpack.c.bf16 %v220, %v219
    %v224 = vld [vmem:[#allocation9] sm:$0xf]
    %v225 = vld [vmem:[#allocation9 + $0x4] sm:$0xf]
    %v226 = vld [vmem:[#allocation9 + $0x8] sm:$0xf]
    %v227 = vld [vmem:[#allocation9 + $0xc] sm:$0xf]
    %v228 = vld [vmem:[#allocation9 + $0x10] sm:$0xf]
    %v229 = vld [vmem:[#allocation9 + $0x14] sm:$0xf]
    %v230 = vld [vmem:[#allocation9 + $0x18] sm:$0xf]
    %v231 = vld [vmem:[#allocation9 + $0x1c] sm:$0xf]
    %v232 = vld [vmem:[#allocation9 + $0x20] sm:$0xf]
    %v233 = vld [vmem:[#allocation9 + $0x24] sm:$0xf]
    %v234 = vld [vmem:[#allocation9 + $0x28] sm:$0xf]
    %v235 = vld [vmem:[#allocation9 + $0x2c] sm:$0xf]
    %v236 = vld [vmem:[#allocation9 + $0x30] sm:$0xf]
    %v237 = vld [vmem:[#allocation9 + $0x34] sm:$0xf]
    %v238 = vld [vmem:[#allocation9 + $0x38] sm:$0xf]
    %v239 = vld [vmem:[#allocation9 + $0x3c] sm:$0xf]
    %v256 = vunpack.c.l.b16 %v224
    %v257 = vunpack.c.l.b16 %v225
    %v258 = vunpack.c.l.b16 %v226
    %v259 = vunpack.c.l.b16 %v227
    %v260 = vunpack.c.l.b16 %v228
    %v261 = vunpack.c.l.b16 %v229
    %v262 = vunpack.c.l.b16 %v230
    %v263 = vunpack.c.l.b16 %v231
    %v264 = vunpack.c.l.b16 %v232
    %v265 = vunpack.c.l.b16 %v233
    %v266 = vunpack.c.l.b16 %v234
    %v267 = vunpack.c.l.b16 %v235
    %v268 = vunpack.c.l.b16 %v236
    %v269 = vunpack.c.l.b16 %v237
    %v270 = vunpack.c.l.b16 %v238
    %v271 = vunpack.c.l.b16 %v239
    %v272 = vpack.c.b16 %v257, %v256
    %v273 = vpack.c.b16 %v259, %v258
    %v274 = vpack.c.b16 %v261, %v260
    %v275 = vpack.c.b16 %v263, %v262
    %v276 = vpack.c.b16 %v265, %v264
    %v277 = vpack.c.b16 %v267, %v266
    %v278 = vpack.c.b16 %v269, %v268
    %v279 = vpack.c.b16 %v271, %v270
    %288 = vmatprep.subr.bf16.mxu0 0
    %289 = vmatpush1.bf16.msra.mxu0 %v272
    %290 = vmatprep.subr.bf16.mxu0 0
    %291 = vmatpush1.bf16.msra.mxu0 %v273
    %292 = vmatprep.subr.bf16.mxu0 0
    %293 = vmatpush1.bf16.msra.mxu0 %v274
    %294 = vmatprep.subr.bf16.mxu0 0
    %295 = vmatpush1.bf16.msra.mxu0 %v275
    %296 = vmatprep.subr.bf16.mxu0 0
    %297 = vmatpush1.bf16.msra.mxu0 %v276
    %298 = vmatprep.subr.bf16.mxu0 0
    %299 = vmatpush1.bf16.msra.mxu0 %v277
    %300 = vmatprep.subr.bf16.mxu0 0
    %301 = vmatpush1.bf16.msra.mxu0 %v278
    %302 = vmatprep.subr.bf16.mxu0 0
    %303 = vmatpush1.bf16.msra.mxu0 %v279
    %304 = vmatprep.subr.bf16.mxu0 0
    %305 = vmatpush1.bf16.msra.mxu0 0
    %306 = vmatprep.subr.bf16.mxu0 0
    %307 = vmatpush1.bf16.msra.mxu0 0
    %308 = vmatprep.subr.bf16.mxu0 0
    %309 = vmatpush1.bf16.msra.mxu0 0
    %310 = vmatprep.subr.bf16.mxu0 0
    %311 = vmatpush1.bf16.msra.mxu0 0
    %312 = vmatprep.subr.bf16.mxu0 0
    %313 = vmatpush1.bf16.msra.mxu0 0
    %314 = vmatprep.subr.bf16.mxu0 0
    %315 = vmatpush1.bf16.msra.mxu0 0
    %316 = vmatprep.subr.bf16.mxu0 0
    %317 = vmatpush1.bf16.msra.mxu0 0
    %318 = vmatprep.subr.bf16.mxu0 0
    %319 = vmatpush1.bf16.msra.mxu0 0
    %320 = vmatprep.mubr.bf16.mxu0 0
    %321 = vmatmul.mubr.bf16.gmra.mrb[0].mxu0 %v223
    %v322 = vpop.f32.mrb[0].mxu0
    %v323 = vadd.f32 0.0, %v322
    %v324 = vpop.f32.mrb[0].mxu0
    %v325 = vpop.f32.mrb[0].mxu0
    %v326 = vadd.f32 0.0, %v325
    %v327 = vpop.f32.mrb[0].mxu0
    %328 = vdwg.mxu0
    %v329 = vadd.f32 %v221, %v323
    %v330 = vadd.f32 %v222, %v326
    %331 = vst [vmem:[#allocation2] sm:$0xff] %v329
    %332 = vst [vmem:[#allocation2 + $0x8] sm:$0xff] %v330
    // Predicated region
    $region46: #{tpu_custom_call.1} parent=1 // pred_check
      %p333 = pneg %p86
    $region47: #{tpu_custom_call.1} parent=1 // pred_check_branch
      %335 = sbr.rel (%p333) target = $region49
    $region48: #{tpu_custom_call.1} parent=1 // pred_region
      %v336 = vld [vmem:[#allocation2] sm:$0xff]
      %v337 = vld [vmem:[#allocation2 + $0x8] sm:$0xff]
      %338 = vst [vmem:[#allocation12] sm:$0xff] %v336
      %339 = vst [vmem:[#allocation12 + $0x8] sm:$0xff] %v337
    $region49: #{tpu_custom_call.1} parent=1 // pred_fallthru
      _
    // Predicated region
    $region50: #{tpu_custom_call.1} parent=1 // pred_check
      _
    $region51: #{tpu_custom_call.1} parent=1 // pred_check_branch
      %341 = sbr.rel (0) target = $region53
    $region52: #{tpu_custom_call.1} parent=1 // pred_region
      %s343 = ssub.s32 256, 256
      %344 = vsyncadd [#allocation5], %s343
      %s345 = sshll.u32 [#allocation12], 4
      %s346 = int_to_ptr.vmem [resolvable:$true] %s345
      %351 = dma.vmem_to_hbm [thread:$0]  %s346, 256, %s5, [#allocation5], 128, 128, 8
    $region53: #{tpu_custom_call.1} parent=1 // pred_fallthru
      _
    // Predicated region
    $region54: #{tpu_custom_call.1} parent=1 // pred_check
      _
    $region55: #{tpu_custom_call.1} parent=1 // pred_check_branch
      %353 = sbr.rel (0) target = $region57
    $region56: #{tpu_custom_call.1} parent=1 // pred_region
      %354 = dma.done [#allocation5], 256
    $region57: #{tpu_custom_call.1} parent=1 // pred_fallthru
      _
    %355 = vsyncpa [#allocation4], 1
    %356 = vsyncpa [#allocation7], 1
    %357 = vsyncpa [#allocation10], 1
    %358 = vsyncpa [#allocation5], 1

</llo_original>
